<compile_context>
chip_gen: v5e
topology: v5e:2x2
jax: 0.10.0
libtpu: 0.0.40
codegen_flags: <defaults>
</compile_context>

<pallas_src>
from functools import partial

import jax
import jax.numpy as jnp
import numpy as np
from jax.experimental import pallas as pl
from jax.experimental.pallas import tpu as pltpu

INPUT_RANGE = 1.0
POINT_DIMS = 3          # stand-in for native.point_dims()
EM0_N, EM0_D = 820, 20
EM1_N, EM1_D = 205, 44
H0, H1, H2 = 128, 96, 1
H1P = 128               # H1 zero-padded to a lane multiple
DIN = POINT_DIMS + EM0_D + EM1_D    # 67


def _round_up(n, m):
    return ((n + m - 1) // m) * m


# ----------------------------- Pallas kernel -------------------------------
def _mlp_kernel(x_ref, w0_ref, b0_ref, w1_ref, b1_ref, w2_ref, b2_ref, out_ref):
    # x: (TB, DIN) bf16; weights bf16 (resident across grid steps); biases f32.
    h = jnp.dot(x_ref[...], w0_ref[...],
                preferred_element_type=jnp.float32) + b0_ref[...]
    h = jnp.clip(h, 0.0, INPUT_RANGE)

    h = jnp.dot(h.astype(jnp.bfloat16), w1_ref[...],
                preferred_element_type=jnp.float32) + b1_ref[...]
    h = jnp.clip(h, 0.0, INPUT_RANGE)

    y = jnp.dot(h.astype(jnp.bfloat16), w2_ref[...],
                preferred_element_type=jnp.float32) + b2_ref[...]
    out_ref[...] = jax.nn.sigmoid(y)


# ------------------------------- wrapper ------------------------------------
@partial(jax.jit, static_argnames=("tile_b",))
def model_forward(params, point, time, tile_b=1024):
    """point: (B, POINT_DIMS) f32, time: (B,) f32 in [0, 1)."""
    B = point.shape[0]
    cdt = jnp.bfloat16

    # Embedding gather + lerp + concat (tiny, data-dependent) in plain JAX.
    def lerp_emb(w, t):
        n = w.shape[0]
        index = t * n
        i0 = jnp.minimum(index.astype(jnp.int32), n - 1)   # trunc == torch .int()
        i1 = jnp.minimum(i0 + 1, n - 1)
        prog = (index - i0.astype(jnp.float32))[:, None]
        a = jnp.take(w, i0, axis=0)
        b = jnp.take(w, i1, axis=0)
        return a + prog * (b - a)

    em0 = lerp_emb(params["em0"], time)
    em1 = lerp_emb(params["em1"], time)
    x = jnp.concatenate([point, em0, em1], axis=1).astype(cdt)     # (B, 67)

    # Batch tiling (pad B up to a tile multiple; tile must be a multiple of 8).
    tb = min(tile_b, _round_up(max(B, 1), 8))
    tb = _round_up(tb, 8)
    b_pad = _round_up(B, tb)
    if b_pad != B:
        x = jnp.pad(x, ((0, b_pad - B), (0, 0)))

    # Weight prep: bf16 weights, f32 biases; zero-pad hidden dim 96 -> 128.
    w0 = params["w0"].astype(cdt)                                    # (67, 128)
    b0 = params["b0"].reshape(1, -1)                                 # (1, 128) f32
    w1 = jnp.pad(params["w1"], ((0, 0), (0, H1P - H1))).astype(cdt)  # (128, 128)
    b1 = jnp.pad(params["b1"], (0, H1P - H1)).reshape(1, -1)         # (1, 128) f32
    w2 = jnp.pad(params["w2"], ((0, H1P - H1), (0, 0))).astype(cdt)  # (128, 1)
    b2 = params["b2"].reshape(1, -1)                                 # (1, 1) f32

    grid = (b_pad // tb,)
    const = lambda i: (0, 0)    # weights/biases: same block every step (fetched once)

    out = pl.pallas_call(
        _mlp_kernel,
        out_shape=jax.ShapeDtypeStruct((b_pad, 1), jnp.float32),
        grid=grid,
        in_specs=[
            pl.BlockSpec((tb, DIN), lambda i: (i, 0)),   # x: streamed per tile
            pl.BlockSpec((DIN, H0), const),
            pl.BlockSpec((1, H0), const),
            pl.BlockSpec((H0, H1P), const),
            pl.BlockSpec((1, H1P), const),
            pl.BlockSpec((H1P, H2), const),
            pl.BlockSpec((1, H2), const),
        ],
        out_specs=pl.BlockSpec((tb, 1), lambda i: (i, 0)),
        compiler_params=pltpu.CompilerParams(
            dimension_semantics=("parallel",),           # 2 TCs on v7x
            vmem_limit_bytes=32 * 1024 * 1024,
        ),
    )(x, w0, b0, w1, b1, w2, b2)

    return out[:B]


# --------------------------- parameter init --------------------------------
def init_params(key):
    ks = jax.random.split(key, 8)

    def linear_init(kw, kb, fan_in, fan_out):
        bound = 1.0 / np.sqrt(fan_in)
        w = jax.random.uniform(kw, (fan_in, fan_out), jnp.float32, -bound, bound)
        b = jax.random.uniform(kb, (fan_out,), jnp.float32, -bound, bound)
        return w, b

    em0 = jax.random.normal(ks[0], (EM0_N, EM0_D), jnp.float32)
    em1 = jax.random.normal(ks[1], (EM1_N, EM1_D), jnp.float32)
    w0, b0 = linear_init(ks[2], ks[3], DIN, H0)
    w1, b1 = linear_init(ks[4], ks[5], H0, H1)
    w2, b2 = linear_init(ks[6], ks[7], H1, H2)
    return dict(em0=em0, em1=em1, w0=w0, b0=b0, w1=w1, b1=b1, w2=w2, b2=b2)


# ------------------------------ reference ----------------------------------
def reference_forward(params, point, time):
    def lerp_emb(w, t):
        n = w.shape[0]
        index = t * n
        i0 = jnp.minimum(index.astype(jnp.int32), n - 1)
        i1 = jnp.minimum(i0 + 1, n - 1)
        prog = (index - i0.astype(jnp.float32)).reshape(-1, 1)
        return w[i0] + prog * (w[i1] - w[i0])

    em0 = lerp_emb(params["em0"], time)
    em1 = lerp_emb(params["em1"], time)
    x = jnp.concatenate([point, em0, em1], axis=1)
    x = jnp.clip(x @ params["w0"] + params["b0"], 0.0, INPUT_RANGE)
    x = jnp.clip(x @ params["w1"] + params["b1"], 0.0, INPUT_RANGE)
    x = x @ params["w2"] + params["b2"]
    return jax.nn.sigmoid(x)


if __name__ == "__main__":
    key = jax.random.PRNGKey(0)
    kp, kt, kw = jax.random.split(key, 3)

    B = 100   # deliberately not a tile multiple -> exercises batch padding
    point = jax.random.uniform(kp, (B, POINT_DIMS), jnp.float32,
                               -INPUT_RANGE, INPUT_RANGE)
    time = jax.random.uniform(kt, (B,), jnp.float32, 0.0, 0.999)

    params = init_params(kw)

    out = jax.block_until_ready(model_forward(params, point, time, tile_b=64))
    ref = reference_forward(params, point, time)

    assert out.shape == (B, 1)
    # bf16 streamed activations/weights -> relaxed tolerance vs f32 reference.
    np.testing.assert_allclose(np.asarray(out), np.asarray(ref),
                               rtol=2e-2, atol=2e-2)
    print("KERNEL_OK")
</pallas_src>

<mosaic_0001>
module attributes {stable_mosaic.version = 11 : i64} {
  func.func @_mlp_kernel(%arg0: i32, %arg1: memref<64x67xbf16, #tpu.memory_space<vmem>>, %arg2: memref<67x128xbf16, #tpu.memory_space<vmem>>, %arg3: memref<1x128xf32, #tpu.memory_space<vmem>>, %arg4: memref<128x128xbf16, #tpu.memory_space<vmem>>, %arg5: memref<1x128xf32, #tpu.memory_space<vmem>>, %arg6: memref<128x1xbf16, #tpu.memory_space<vmem>>, %arg7: memref<1x1xf32, #tpu.memory_space<vmem>>, %arg8: memref<64x1xf32, #tpu.memory_space<vmem>>) attributes {dimension_semantics = [#tpu.dimension_semantics<parallel>], iteration_bounds = array<i64: 2>, scalar_prefetch = 0 : i64, scratch_operands = 0 : i64, tpu.core_type = #tpu.core_type<tc>, window_params = [{transform_indices = @transform_0, window_bounds = array<i64: 64, 67>}, {pipeline_mode = #tpu.pipeline_mode<synchronous>, transform_indices = @transform_1, window_bounds = array<i64: 67, 128>}, {pipeline_mode = #tpu.pipeline_mode<synchronous>, transform_indices = @transform_2, window_bounds = array<i64: 1, 128>}, {pipeline_mode = #tpu.pipeline_mode<synchronous>, transform_indices = @transform_3, window_bounds = array<i64: 128, 128>}, {pipeline_mode = #tpu.pipeline_mode<synchronous>, transform_indices = @transform_4, window_bounds = array<i64: 1, 128>}, {pipeline_mode = #tpu.pipeline_mode<synchronous>, transform_indices = @transform_5, window_bounds = array<i64: 128, 1>}, {pipeline_mode = #tpu.pipeline_mode<synchronous>, transform_indices = @transform_6, window_bounds = array<i64: 1, 1>}, {transform_indices = @transform_7, window_bounds = array<i64: 64, 1>}]} {
    %c0 = arith.constant 0 : index
    %c0_0 = arith.constant 0 : index
    %0 = vector.load %arg1[%c0, %c0_0] : memref<64x67xbf16, #tpu.memory_space<vmem>>, vector<64x67xbf16>
    %c0_1 = arith.constant 0 : index
    %c0_2 = arith.constant 0 : index
    %1 = vector.load %arg2[%c0_1, %c0_2] : memref<67x128xbf16, #tpu.memory_space<vmem>>, vector<67x128xbf16>
    %cst = arith.constant dense<0.000000e+00> : vector<64x128xf32>
    %2 = tpu.matmul %0, %1, %cst {dimension_numbers = #tpu.dot_dimension_numbers<[1], [0], [0], [1], [0, 0, 1, 1], [], []>} : vector<64x67xbf16>, vector<67x128xbf16>, vector<64x128xf32> -> vector<64x128xf32>
    %c0_3 = arith.constant 0 : index
    %c0_4 = arith.constant 0 : index
    %3 = vector.load %arg3[%c0_3, %c0_4] : memref<1x128xf32, #tpu.memory_space<vmem>>, vector<1x128xf32>
    %4 = vector.broadcast %3 : vector<1x128xf32> to vector<64x128xf32>
    %5 = arith.addf %2, %4 : vector<64x128xf32>
    %cst_5 = arith.constant 0.000000e+00 : f32
    %cst_6 = arith.constant 1.000000e+00 : f32
    %6 = vector.broadcast %cst_5 : f32 to vector<64x128xf32>
    %7 = arith.maximumf %6, %5 : vector<64x128xf32>
    %8 = vector.broadcast %cst_6 : f32 to vector<64x128xf32>
    %9 = arith.minimumf %8, %7 : vector<64x128xf32>
    %10 = arith.truncf %9 : vector<64x128xf32> to vector<64x128xbf16>
    %c0_7 = arith.constant 0 : index
    %c0_8 = arith.constant 0 : index
    %11 = vector.load %arg4[%c0_7, %c0_8] : memref<128x128xbf16, #tpu.memory_space<vmem>>, vector<128x128xbf16>
    %cst_9 = arith.constant dense<0.000000e+00> : vector<64x128xf32>
    %12 = tpu.matmul %10, %11, %cst_9 {dimension_numbers = #tpu.dot_dimension_numbers<[1], [0], [0], [1], [0, 0, 1, 1], [], []>} : vector<64x128xbf16>, vector<128x128xbf16>, vector<64x128xf32> -> vector<64x128xf32>
    %c0_10 = arith.constant 0 : index
    %c0_11 = arith.constant 0 : index
    %13 = vector.load %arg5[%c0_10, %c0_11] : memref<1x128xf32, #tpu.memory_space<vmem>>, vector<1x128xf32>
    %14 = vector.broadcast %13 : vector<1x128xf32> to vector<64x128xf32>
    %15 = arith.addf %12, %14 : vector<64x128xf32>
    %cst_12 = arith.constant 0.000000e+00 : f32
    %cst_13 = arith.constant 1.000000e+00 : f32
    %16 = vector.broadcast %cst_12 : f32 to vector<64x128xf32>
    %17 = arith.maximumf %16, %15 : vector<64x128xf32>
    %18 = vector.broadcast %cst_13 : f32 to vector<64x128xf32>
    %19 = arith.minimumf %18, %17 : vector<64x128xf32>
    %20 = arith.truncf %19 : vector<64x128xf32> to vector<64x128xbf16>
    %c0_14 = arith.constant 0 : index
    %c0_15 = arith.constant 0 : index
    %21 = vector.load %arg6[%c0_14, %c0_15] : memref<128x1xbf16, #tpu.memory_space<vmem>>, vector<128x1xbf16>
    %cst_16 = arith.constant dense<0.000000e+00> : vector<64x1xf32>
    %22 = tpu.matmul %20, %21, %cst_16 {dimension_numbers = #tpu.dot_dimension_numbers<[1], [0], [0], [1], [0, 0, 1, 1], [], []>} : vector<64x128xbf16>, vector<128x1xbf16>, vector<64x1xf32> -> vector<64x1xf32>
    %c0_17 = arith.constant 0 : index
    %c0_18 = arith.constant 0 : index
    %23 = vector.load %arg7[%c0_17, %c0_18] : memref<1x1xf32, #tpu.memory_space<vmem>>, vector<1x1xf32>
    %24 = vector.broadcast %23 : vector<1x1xf32> to vector<64x1xf32>
    %25 = arith.addf %22, %24 : vector<64x1xf32>
    %26 = arith.negf %25 : vector<64x1xf32>
    %27 = math.exp %26 : vector<64x1xf32>
    %cst_19 = arith.constant 1.000000e+00 : f32
    %28 = vector.broadcast %cst_19 : f32 to vector<64x1xf32>
    %29 = arith.addf %28, %27 : vector<64x1xf32>
    %30 = arith.divf %28, %29 : vector<64x1xf32>
    %c0_20 = arith.constant 0 : index
    %c0_21 = arith.constant 0 : index
    %31 = vector.load %arg8[%c0_20, %c0_21] : memref<64x1xf32, #tpu.memory_space<vmem>>, vector<64x1xf32>
    tpu.vector_store %arg8[%c0_20, %c0_21], %30 {strides = array<i32>} : memref<64x1xf32, #tpu.memory_space<vmem>>, vector<64x1xf32>,
    return
  }
  func.func @transform_0(%arg0: i32) -> (i32, i32) {
    %c0_i32 = arith.constant 0 : i32
    %c0_i32_0 = arith.constant 0 : i32
    return %arg0, %c0_i32 : i32, i32
  }
  func.func @transform_1(%arg0: i32) -> (i32, i32) {
    %c0_i32 = arith.constant 0 : i32
    %c0_i32_0 = arith.constant 0 : i32
    %c0_i32_1 = arith.constant 0 : i32
    return %c0_i32, %c0_i32_0 : i32, i32
  }
  func.func @transform_2(%arg0: i32) -> (i32, i32) {
    %c0_i32 = arith.constant 0 : i32
    %c0_i32_0 = arith.constant 0 : i32
    %c0_i32_1 = arith.constant 0 : i32
    return %c0_i32, %c0_i32_0 : i32, i32
  }
  func.func @transform_3(%arg0: i32) -> (i32, i32) {
    %c0_i32 = arith.constant 0 : i32
    %c0_i32_0 = arith.constant 0 : i32
    %c0_i32_1 = arith.constant 0 : i32
    return %c0_i32, %c0_i32_0 : i32, i32
  }
  func.func @transform_4(%arg0: i32) -> (i32, i32) {
    %c0_i32 = arith.constant 0 : i32
    %c0_i32_0 = arith.constant 0 : i32
    %c0_i32_1 = arith.constant 0 : i32
    return %c0_i32, %c0_i32_0 : i32, i32
  }
  func.func @transform_5(%arg0: i32) -> (i32, i32) {
    %c0_i32 = arith.constant 0 : i32
    %c0_i32_0 = arith.constant 0 : i32
    %c0_i32_1 = arith.constant 0 : i32
    return %c0_i32, %c0_i32_0 : i32, i32
  }
  func.func @transform_6(%arg0: i32) -> (i32, i32) {
    %c0_i32 = arith.constant 0 : i32
    %c0_i32_0 = arith.constant 0 : i32
    %c0_i32_1 = arith.constant 0 : i32
    return %c0_i32, %c0_i32_0 : i32, i32
  }
  func.func @transform_7(%arg0: i32) -> (i32, i32) {
    %c0_i32 = arith.constant 0 : i32
    %c0_i32_0 = arith.constant 0 : i32
    return %arg0, %c0_i32 : i32, i32
  }
}

</mosaic_0001>

<llo_original>
// kernel: model_forward.1
$region0: #{model_forward.1}
  #allocation0 [shape = 'u32[]', space=smem, size = 0x4, offset = 0x4, fixed_abs, tag = 'smem constant byte address 0x4 - core index']
  #allocation1 [shape = 'u32[72,128]{1,0:T(1,128)}', space=vmem, size = 0x9000, scoped, tag = 'internal scratch']
  #allocation2 [shape = 'f32[1,1]{1,0:T(1,128)S(1)}', space=vmem, size = 0x200, scoped, tag = 'scoped memory for model_forward.1']
  %s0 = inlined_call_operand.vmem [shape: bf16[128,67], index: 0, kind: input, shape index: {}]
  %s1 = inlined_call_operand.vmem [shape: bf16[67,128], index: 1, kind: input, shape index: {}]
  %s2 = inlined_call_operand.vmem [shape: f32[1,128], index: 2, kind: input, shape index: {}]
  %s3 = inlined_call_operand.vmem [shape: bf16[128,128], index: 3, kind: input, shape index: {}]
  %s4 = inlined_call_operand.vmem [shape: f32[1,128], index: 4, kind: input, shape index: {}]
  %s5 = inlined_call_operand.vmem [shape: bf16[128,1], index: 5, kind: input, shape index: {}]
  %s6 = inlined_call_operand.<no memory space> [shape: f32[1,1], index: 6, kind: input, shape index: {}]
  %s7 = inlined_call_operand.vmem [shape: f32[128,1], index: 7, kind: output, shape index: {}]
  %s8 = sld [smem:[#allocation0]]
  $region61: #{model_forward.1} parent=0
    _
  %s10 = ssub.s32 1, %s8
  %s11 = scalar_select 0, %s10, %s8
  %v12 = vstv %s6
  %13 = vst [vmem:[#allocation2] sm:$0x1] %v12
  loop: start=0, step=1, limit=4
  $region2: #{model_forward.1} parent=0 // loop_pre_header
    _
  $region3: #{model_forward.1} parent=0 // loop_header
    %s15 = sphi 0, %s19
    %p16 = scmp.ge.s32.totalorder %s15, 4
    %s25 = sphi 0, %s27
    %s28 = sphi 0, %s25
    %s29 = sphi 0, %s28
    %s45 = sphi 0, %s29
    %s49 = sphi 0, %s49
    %s51 = sphi 0, %s49
    %s52 = sphi 0, %s51
    %s66 = sphi 0, %s52
    %s70 = sphi 0, %s70
    %s72 = sphi 0, %s70
    %s73 = sphi 0, %s72
    %s87 = sphi 0, %s73
    %s91 = sphi 0, %s91
    %s93 = sphi 0, %s91
    %s94 = sphi 0, %s93
    %s108 = sphi 0, %s94
    %s112 = sphi 0, %s112
    %s114 = sphi 0, %s112
    %s115 = sphi 0, %s114
    %s129 = sphi 0, %s115
    %s133 = sphi 0, %s133
    %s135 = sphi 0, %s133
    %s136 = sphi 0, %s135
    %s150 = sphi 0, %s136
    %s154 = sphi 0, %s154
    %s156 = sphi 0, %s154
    %s157 = sphi 0, %s156
    %s171 = sphi 0, %s157
    %s177 = sphi 0, %s179
    %s180 = sphi 0, %s177
    %s181 = sphi 0, %s180
    %s197 = sphi 0, %s181
  $region4: #{model_forward.1} parent=0 // loop_header_branch
    %18 = sbr.rel (%p16) target = $region8
  $region5: #{model_forward.1} parent=0 // loop_body
    %s20 = ssub.s32 %s15, 1
    %s21 = ssub.s32 %s15, 2
    %s22 = sadd.s32 %s15, 1
    %s23 = ssub.s32 %s15, %s22
    %p24 = scmp.eq.s32.totalorder %s23, 0
    %s26 = sadd.s32 %s25, 1
    %s27 = scalar_select %p24, %s25, %s26
    %p30 = pneg %p24
    %p31 = scmp.eq.s32.totalorder %s15, 1
    %p32 = por %p30, %p31
    %p33 = scmp.ne.s32.totalorder %s25, %s28
    %p34 = scmp.eq.s32.totalorder %s15, 0
    %p35 = por %p33, %p34
    %p36 = scmp.ne.s32.totalorder %s25, %s28
    %p37 = scmp.eq.s32.totalorder %s20, 1
    %p38 = por %p36, %p37
    %p39 = scmp.ne.s32.totalorder %s28, %s29
    %p40 = scmp.eq.s32.totalorder %s20, 0
    %p41 = por %p39, %p40
    %p42 = scmp.ne.s32.totalorder %s28, %s29
    %p43 = scmp.eq.s32.totalorder %s21, 1
    %p44 = por %p42, %p43
    %p46 = scmp.ne.s32.totalorder %s29, %s45
    %p47 = scmp.eq.s32.totalorder %s21, 0
    %p48 = por %p46, %p47
    %s50 = sadd.s32 %s49, 1
    %p53 = scmp.eq.s32.totalorder %s15, 1
    %p54 = scmp.ne.s32.totalorder %s49, %s51
    %p55 = scmp.eq.s32.totalorder %s15, 0
    %p56 = por %p54, %p55
    %p57 = scmp.ne.s32.totalorder %s49, %s51
    %p58 = scmp.eq.s32.totalorder %s20, 1
    %p59 = por %p57, %p58
    %p60 = scmp.ne.s32.totalorder %s51, %s52
    %p61 = scmp.eq.s32.totalorder %s20, 0
    %p62 = por %p60, %p61
    %p63 = scmp.ne.s32.totalorder %s51, %s52
    %p64 = scmp.eq.s32.totalorder %s21, 1
    %p65 = por %p63, %p64
    %p67 = scmp.ne.s32.totalorder %s52, %s66
    %p68 = scmp.eq.s32.totalorder %s21, 0
    %p69 = por %p67, %p68
    %s71 = sadd.s32 %s70, 1
    %p74 = scmp.eq.s32.totalorder %s15, 1
    %p75 = scmp.ne.s32.totalorder %s70, %s72
    %p76 = scmp.eq.s32.totalorder %s15, 0
    %p77 = por %p75, %p76
    %p78 = scmp.ne.s32.totalorder %s70, %s72
    %p79 = scmp.eq.s32.totalorder %s20, 1
    %p80 = por %p78, %p79
    %p81 = scmp.ne.s32.totalorder %s72, %s73
    %p82 = scmp.eq.s32.totalorder %s20, 0
    %p83 = por %p81, %p82
    %p84 = scmp.ne.s32.totalorder %s72, %s73
    %p85 = scmp.eq.s32.totalorder %s21, 1
    %p86 = por %p84, %p85
    %p88 = scmp.ne.s32.totalorder %s73, %s87
    %p89 = scmp.eq.s32.totalorder %s21, 0
    %p90 = por %p88, %p89
    %s92 = sadd.s32 %s91, 1
    %p95 = scmp.eq.s32.totalorder %s15, 1
    %p96 = scmp.ne.s32.totalorder %s91, %s93
    %p97 = scmp.eq.s32.totalorder %s15, 0
    %p98 = por %p96, %p97
    %p99 = scmp.ne.s32.totalorder %s91, %s93
    %p100 = scmp.eq.s32.totalorder %s20, 1
    %p101 = por %p99, %p100
    %p102 = scmp.ne.s32.totalorder %s93, %s94
    %p103 = scmp.eq.s32.totalorder %s20, 0
    %p104 = por %p102, %p103
    %p105 = scmp.ne.s32.totalorder %s93, %s94
    %p106 = scmp.eq.s32.totalorder %s21, 1
    %p107 = por %p105, %p106
    %p109 = scmp.ne.s32.totalorder %s94, %s108
    %p110 = scmp.eq.s32.totalorder %s21, 0
    %p111 = por %p109, %p110
    %s113 = sadd.s32 %s112, 1
    %p116 = scmp.eq.s32.totalorder %s15, 1
    %p117 = scmp.ne.s32.totalorder %s112, %s114
    %p118 = scmp.eq.s32.totalorder %s15, 0
    %p119 = por %p117, %p118
    %p120 = scmp.ne.s32.totalorder %s112, %s114
    %p121 = scmp.eq.s32.totalorder %s20, 1
    %p122 = por %p120, %p121
    %p123 = scmp.ne.s32.totalorder %s114, %s115
    %p124 = scmp.eq.s32.totalorder %s20, 0
    %p125 = por %p123, %p124
    %p126 = scmp.ne.s32.totalorder %s114, %s115
    %p127 = scmp.eq.s32.totalorder %s21, 1
    %p128 = por %p126, %p127
    %p130 = scmp.ne.s32.totalorder %s115, %s129
    %p131 = scmp.eq.s32.totalorder %s21, 0
    %p132 = por %p130, %p131
    %s134 = sadd.s32 %s133, 1
    %p137 = scmp.eq.s32.totalorder %s15, 1
    %p138 = scmp.ne.s32.totalorder %s133, %s135
    %p139 = scmp.eq.s32.totalorder %s15, 0
    %p140 = por %p138, %p139
    %p141 = scmp.ne.s32.totalorder %s133, %s135
    %p142 = scmp.eq.s32.totalorder %s20, 1
    %p143 = por %p141, %p142
    %p144 = scmp.ne.s32.totalorder %s135, %s136
    %p145 = scmp.eq.s32.totalorder %s20, 0
    %p146 = por %p144, %p145
    %p147 = scmp.ne.s32.totalorder %s135, %s136
    %p148 = scmp.eq.s32.totalorder %s21, 1
    %p149 = por %p147, %p148
    %p151 = scmp.ne.s32.totalorder %s136, %s150
    %p152 = scmp.eq.s32.totalorder %s21, 0
    %p153 = por %p151, %p152
    %s155 = sadd.s32 %s154, 1
    %p158 = scmp.eq.s32.totalorder %s15, 1
    %p159 = scmp.ne.s32.totalorder %s154, %s156
    %p160 = scmp.eq.s32.totalorder %s15, 0
    %p161 = por %p159, %p160
    %p162 = scmp.ne.s32.totalorder %s154, %s156
    %p163 = scmp.eq.s32.totalorder %s20, 1
    %p164 = por %p162, %p163
    %p165 = scmp.ne.s32.totalorder %s156, %s157
    %p166 = scmp.eq.s32.totalorder %s20, 0
    %p167 = por %p165, %p166
    %p168 = scmp.ne.s32.totalorder %s156, %s157
    %p169 = scmp.eq.s32.totalorder %s21, 1
    %p170 = por %p168, %p169
    %p172 = scmp.ne.s32.totalorder %s157, %s171
    %p173 = scmp.eq.s32.totalorder %s21, 0
    %p174 = por %p172, %p173
    %s175 = ssub.s32 %s15, %s22
    %p176 = scmp.eq.s32.totalorder %s175, 0
    %s178 = sadd.s32 %s177, 1
    %s179 = scalar_select %p176, %s177, %s178
    %p182 = pneg %p176
    %p183 = scmp.eq.s32.totalorder %s15, 1
    %p184 = por %p182, %p183
    %p185 = scmp.ne.s32.totalorder %s177, %s180
    %p186 = scmp.eq.s32.totalorder %s15, 0
    %p187 = por %p185, %p186
    %p188 = scmp.ne.s32.totalorder %s177, %s180
    %p189 = scmp.eq.s32.totalorder %s20, 1
    %p190 = por %p188, %p189
    %p191 = scmp.ne.s32.totalorder %s180, %s181
    %p192 = scmp.eq.s32.totalorder %s20, 0
    %p193 = por %p191, %p192
    %p194 = scmp.ne.s32.totalorder %s180, %s181
    %p195 = scmp.eq.s32.totalorder %s21, 1
    %p196 = por %p194, %p195
    %p198 = scmp.ne.s32.totalorder %s181, %s197
    %p199 = scmp.eq.s32.totalorder %s21, 0
    %p200 = por %p198, %p199
    %p201 = scmp.le.s32.totalorder 1, %s15
    %p202 = scmp.lt.s32.totalorder %s15, 3
    %p203 = pnand %p201, %p202
    %p204 = pneg %p203
    // Predicated region
    $region9: #{model_forward.1} parent=5 // pred_check
      _
    $region10: #{model_forward.1} parent=5 // pred_check_branch
      %206 = sbr.rel (%p203) target = $region12
    $region11: #{model_forward.1} parent=5 // pred_region
      %s207 = ssub.s32 %s15, 1
      // Predicated region
      $region13: #{model_forward.1} parent=11 // pred_check
        %p208 = pneg %p62
      $region14: #{model_forward.1} parent=11 // pred_check_branch
        %210 = sbr.rel (%p208) target = $region16
      $region15: #{model_forward.1} parent=11 // pred_region
        _
      $region16: #{model_forward.1} parent=11 // pred_fallthru
        _
      // Predicated region
      $region17: #{model_forward.1} parent=11 // pred_check
        %p211 = pneg %p83
      $region18: #{model_forward.1} parent=11 // pred_check_branch
        %213 = sbr.rel (%p211) target = $region20
      $region19: #{model_forward.1} parent=11 // pred_region
        _
      $region20: #{model_forward.1} parent=11 // pred_fallthru
        _
      // Predicated region
      $region21: #{model_forward.1} parent=11 // pred_check
        %p214 = pneg %p104
      $region22: #{model_forward.1} parent=11 // pred_check_branch
        %216 = sbr.rel (%p214) target = $region24
      $region23: #{model_forward.1} parent=11 // pred_region
        _
      $region24: #{model_forward.1} parent=11 // pred_fallthru
        _
      // Predicated region
      $region25: #{model_forward.1} parent=11 // pred_check
        %p217 = pneg %p125
      $region26: #{model_forward.1} parent=11 // pred_check_branch
        %219 = sbr.rel (%p217) target = $region28
      $region27: #{model_forward.1} parent=11 // pred_region
        _
      $region28: #{model_forward.1} parent=11 // pred_fallthru
        _
      // Predicated region
      $region29: #{model_forward.1} parent=11 // pred_check
        %p220 = pneg %p146
      $region30: #{model_forward.1} parent=11 // pred_check_branch
        %222 = sbr.rel (%p220) target = $region32
      $region31: #{model_forward.1} parent=11 // pred_region
        _
      $region32: #{model_forward.1} parent=11 // pred_fallthru
        _
      // Predicated region
      $region33: #{model_forward.1} parent=11 // pred_check
        %p223 = pneg %p167
      $region34: #{model_forward.1} parent=11 // pred_check_branch
        %225 = sbr.rel (%p223) target = $region36
      $region35: #{model_forward.1} parent=11 // pred_region
        _
      $region36: #{model_forward.1} parent=11 // pred_fallthru
        _
    $region12: #{model_forward.1} parent=5 // pred_fallthru
      _
    %p226 = scmp.lt.s32.totalorder %s15, 2
    // Predicated region
    $region37: #{model_forward.1} parent=5 // pred_check
      %p227 = pneg %p226
    $region38: #{model_forward.1} parent=5 // pred_check_branch
      %229 = sbr.rel (%p227) target = $region40
    $region39: #{model_forward.1} parent=5 // pred_region
      // Predicated region
      $region41: #{model_forward.1} parent=39 // pred_check
        %p230 = pneg %p35
      $region42: #{model_forward.1} parent=39 // pred_check_branch
        %232 = sbr.rel (%p230) target = $region44
      $region43: #{model_forward.1} parent=39 // pred_region
        %s233 = smul.u32 8, %s15
        %p234 = scmp.lt.s32.totalorder %s233, 15
        %s235 = scalar_select %p234, %s233, 15
        %s236 = smul.addr %s235, 4
        %s237 = scalar_lea.vmem %s0, %s236
        %s238 = smul.u32 8, %s15
      $region44: #{model_forward.1} parent=39 // pred_fallthru
        _
    $region40: #{model_forward.1} parent=5 // pred_fallthru
      _
    %p239 = scmp.le.s32.totalorder 1, %s15
    %p240 = scmp.lt.s32.totalorder %s15, 3
    %p241 = pnand %p239, %p240
    %p242 = pneg %p241
    // Predicated region
    $region45: #{model_forward.1} parent=5 // pred_check
      _
    $region46: #{model_forward.1} parent=5 // pred_check_branch
      %244 = sbr.rel (%p241) target = $region48
    $region47: #{model_forward.1} parent=5 // pred_region
      %s245 = ssub.s32 %s15, 1
      %s246 = smul.u32 8, %s20
      %p247 = scmp.lt.s32.totalorder %s246, 15
      %s248 = scalar_select %p247, %s246, 15
      %s249 = smul.addr %s248, 4
      %s250 = scalar_lea.vmem %s0, %s249
      %p251 = pneg %p41
      %p252 = pneg %p38
      %p253 = pneg %p62
      %p254 = pneg %p59
      %p255 = pneg %p83
      %p256 = pneg %p80
      %p257 = pneg %p104
      %p258 = pneg %p101
      %p259 = pneg %p125
      %p260 = pneg %p122
      %p261 = pneg %p146
      %p262 = pneg %p143
      %p263 = pneg %p167
      %p264 = pneg %p164
      %p265 = pneg %p193
      %p266 = pneg %p190
      %s267 = smul.u32 8, %s20
      %p268 = scmp.lt.s32.totalorder %s267, 15
      %s269 = scalar_select %p268, %s267, 15
      %s270 = smul.addr %s269, 8
      %s271 = scalar_lea.vmem %s7, %s270
      %s272 = smul.u32 8, %s20
      %p273 = scmp.lt.s32.totalorder %s272, 15
      %s274 = scalar_select %p273, %s272, 15
      %s275 = smul.addr %s274, 4
      %s276 = scalar_lea.vmem %s0, %s275
      %s277 = smul.u32 8, %s20
      %s278 = smul.u32 8, %s20
      %p279 = scmp.lt.s32.totalorder %s278, 15
      %s280 = scalar_select %p279, %s278, 15
      %s281 = smul.addr %s280, 8
      %s282 = scalar_lea.vmem %s7, %s281
      %s283 = smul.u32 8, %s20
      %v285 = vld [vmem:[%s276] sm:$0xf]
      %v286 = vld [vmem:[%s276 + $0x4] sm:$0xf]
      %v287 = vld [vmem:[%s276 + $0x8] sm:$0xf]
      %v288 = vld [vmem:[%s276 + $0xc] sm:$0xf]
      %v289 = vld [vmem:[%s276 + $0x10] sm:$0xf]
      %v290 = vld [vmem:[%s276 + $0x14] sm:$0xf]
      %v291 = vld [vmem:[%s276 + $0x18] sm:$0xf]
      %v292 = vld [vmem:[%s276 + $0x1c] sm:$0xf]
      %v293 = vld [vmem:[%s1] sm:$0xf]
      %v294 = vld [vmem:[%s1 + $0x4] sm:$0xf]
      %v295 = vld [vmem:[%s1 + $0x8] sm:$0xf]
      %v296 = vld [vmem:[%s1 + $0xc] sm:$0xf]
      %v297 = vld [vmem:[%s1 + $0x10] sm:$0xf]
      %v298 = vld [vmem:[%s1 + $0x14] sm:$0xf]
      %v299 = vld [vmem:[%s1 + $0x18] sm:$0xf]
      %v300 = vld [vmem:[%s1 + $0x1c] sm:$0xf]
      %v301 = vld [vmem:[%s1 + $0x20] sm:$0x3]
      %v302 = vld [vmem:[%s2] sm:$0x1]
      %v304 = vperm.slane %v302, 0
      %v314 = vunpack.c.l.b16 %v285
      %v315 = vunpack.c.l.b16 %v286
      %v316 = vunpack.c.l.b16 %v287
      %v317 = vunpack.c.l.b16 %v288
      %v318 = vunpack.c.l.b16 %v289
      %v319 = vunpack.c.l.b16 %v290
      %v320 = vunpack.c.l.b16 %v291
      %v321 = vunpack.c.l.b16 %v292
      %v322 = vpack.c.b16 %v315, %v314
      %v323 = vpack.c.b16 %v317, %v316
      %v324 = vpack.c.b16 %v319, %v318
      %v325 = vpack.c.b16 %v321, %v320
      %v335 = vunpack.c.l.b16 %v293
      %v336 = vunpack.c.l.b16 %v294
      %v337 = vunpack.c.l.b16 %v295
      %v338 = vunpack.c.l.b16 %v296
      %v339 = vunpack.c.l.b16 %v297
      %v340 = vunpack.c.l.b16 %v298
      %v341 = vunpack.c.l.b16 %v299
      %v342 = vunpack.c.l.b16 %v300
      %v343 = vunpack.c.l.b16 %v301
      %v344 = vpack.c.b16 %v336, %v335
      %v345 = vpack.c.b16 %v338, %v337
      %v346 = vpack.c.b16 %v340, %v339
      %v347 = vpack.c.b16 %v342, %v341
      %v348 = vpack.c.b16 %v343, %v343
      %vm353 = vcmask 547840
      %v355 = vsel %vm353, %v322, 0
      %v358 = vsel %vm353, %v323, 0
      %v361 = vsel %vm353, %v324, 0
      %v364 = vsel %vm353, %v325, 0
      %vm366 = vcmask 1040384
      %vm367 = vcmask 1041408
      %v368 = vsel %vm366, 4294967295, 65535
      %v369 = vsel %vm367, %v368, 0
      %v371 = vand.u32 %v348, %v369
      %373 = vmatpush.bf16.msra.mxu0 0
      %374 = vmatpush.bf16.msra.mxu0 0
      %375 = vmatpush.bf16.msra.mxu0 0
      %376 = vmatpush.bf16.msra.mxu0 %v371
      %377 = vmatpush.bf16.msra.mxu0 %v347
      %378 = vmatpush.bf16.msra.mxu0 %v346
      %379 = vmatpush.bf16.msra.mxu0 %v345
      %380 = vmatpush.bf16.msra.mxu0 %v344
      %381 = vmatmul.bf16.gmra.mxu0 %v355
      %v382 = vpop.f32.mrf.mxu0
      %v383 = vadd.f32 %v304, %v382
      %v384 = vpop.f32.mrf.mxu0
      %v385 = vadd.f32 %v304, %v384
      %386 = vmatmul.bf16.gmra.mxu0 %v358
      %v387 = vpop.f32.mrf.mxu0
      %v388 = vadd.f32 %v304, %v387
      %v389 = vpop.f32.mrf.mxu0
      %v390 = vadd.f32 %v304, %v389
      %391 = vmatmul.bf16.gmra.mxu0 %v361
      %v392 = vpop.f32.mrf.mxu0
      %v393 = vadd.f32 %v304, %v392
      %v394 = vpop.f32.mrf.mxu0
      %v395 = vadd.f32 %v304, %v394
      %396 = vmatmul.bf16.gmra.mxu0 %v364
      %v397 = vpop.f32.mrf.mxu0
      %v398 = vadd.f32 %v304, %v397
      %v399 = vpop.f32.mrf.mxu0
      %v400 = vadd.f32 %v304, %v399
      %401 = vdwg.mxu0
      %v402 = vmax.f32 %v383, 0.0
      %v403 = vmax.f32 %v385, 0.0
      %v404 = vmax.f32 %v388, 0.0
      %v405 = vmax.f32 %v390, 0.0
      %v406 = vmax.f32 %v393, 0.0
      %v407 = vmax.f32 %v395, 0.0
      %v408 = vmax.f32 %v398, 0.0
      %v409 = vmax.f32 %v400, 0.0
      %v410 = vmin.f32 %v402, 1.0
      %v411 = vmin.f32 %v403, 1.0
      %v412 = vmin.f32 %v404, 1.0
      %v413 = vmin.f32 %v405, 1.0
      %v414 = vmin.f32 %v406, 1.0
      %v415 = vmin.f32 %v407, 1.0
      %v416 = vmin.f32 %v408, 1.0
      %v417 = vmin.f32 %v409, 1.0
      %v418 = vpack.c.bf16 %v411, %v410
      %v419 = vpack.c.bf16 %v413, %v412
      %v420 = vpack.c.bf16 %v415, %v414
      %v421 = vpack.c.bf16 %v417, %v416
      %v422 = vld [vmem:[%s3] sm:$0xf]
      %v423 = vld [vmem:[%s3 + $0x4] sm:$0xf]
      %v424 = vld [vmem:[%s3 + $0x8] sm:$0xf]
      %v425 = vld [vmem:[%s3 + $0xc] sm:$0xf]
      %v426 = vld [vmem:[%s3 + $0x10] sm:$0xf]
      %v427 = vld [vmem:[%s3 + $0x14] sm:$0xf]
      %v428 = vld [vmem:[%s3 + $0x18] sm:$0xf]
      %v429 = vld [vmem:[%s3 + $0x1c] sm:$0xf]
      %v430 = vld [vmem:[%s3 + $0x20] sm:$0xf]
      %v431 = vld [vmem:[%s3 + $0x24] sm:$0xf]
      %v432 = vld [vmem:[%s3 + $0x28] sm:$0xf]
      %v433 = vld [vmem:[%s3 + $0x2c] sm:$0xf]
      %v434 = vld [vmem:[%s3 + $0x30] sm:$0xf]
      %v435 = vld [vmem:[%s3 + $0x34] sm:$0xf]
      %v436 = vld [vmem:[%s3 + $0x38] sm:$0xf]
      %v437 = vld [vmem:[%s3 + $0x3c] sm:$0xf]
      %v438 = vld [vmem:[%s4] sm:$0x1]
      %v440 = vperm.slane %v438, 0
      %v458 = vunpack.c.l.b16 %v422
      %v459 = vunpack.c.l.b16 %v423
      %v460 = vunpack.c.l.b16 %v424
      %v461 = vunpack.c.l.b16 %v425
      %v462 = vunpack.c.l.b16 %v426
      %v463 = vunpack.c.l.b16 %v427
      %v464 = vunpack.c.l.b16 %v428
      %v465 = vunpack.c.l.b16 %v429
      %v466 = vunpack.c.l.b16 %v430
      %v467 = vunpack.c.l.b16 %v431
      %v468 = vunpack.c.l.b16 %v432
      %v469 = vunpack.c.l.b16 %v433
      %v470 = vunpack.c.l.b16 %v434
      %v471 = vunpack.c.l.b16 %v435
      %v472 = vunpack.c.l.b16 %v436
      %v473 = vunpack.c.l.b16 %v437
      %v474 = vpack.c.b16 %v459, %v458
      %v475 = vpack.c.b16 %v461, %v460
      %v476 = vpack.c.b16 %v463, %v462
      %v477 = vpack.c.b16 %v465, %v464
      %v478 = vpack.c.b16 %v467, %v466
      %v479 = vpack.c.b16 %v469, %v468
      %v480 = vpack.c.b16 %v471, %v470
      %v481 = vpack.c.b16 %v473, %v472
      %490 = vmatpush.bf16.msra.mxu0 %v481
      %491 = vmatpush.bf16.msra.mxu0 %v480
      %492 = vmatpush.bf16.msra.mxu0 %v479
      %493 = vmatpush.bf16.msra.mxu0 %v478
      %494 = vmatpush.bf16.msra.mxu0 %v477
      %495 = vmatpush.bf16.msra.mxu0 %v476
      %496 = vmatpush.bf16.msra.mxu0 %v475
      %497 = vmatpush.bf16.msra.mxu0 %v474
      %498 = vmatmul.bf16.gmra.mxu0 %v418
      %v499 = vpop.f32.mrf.mxu0
      %v500 = vadd.f32 %v440, %v499
      %v501 = vpop.f32.mrf.mxu0
      %v502 = vadd.f32 %v440, %v501
      %503 = vmatmul.bf16.gmra.mxu0 %v419
      %v504 = vpop.f32.mrf.mxu0
      %v505 = vadd.f32 %v440, %v504
      %v506 = vpop.f32.mrf.mxu0
      %v507 = vadd.f32 %v440, %v506
      %508 = vmatmul.bf16.gmra.mxu0 %v420
      %v509 = vpop.f32.mrf.mxu0
      %v510 = vadd.f32 %v440, %v509
      %v511 = vpop.f32.mrf.mxu0
      %v512 = vadd.f32 %v440, %v511
      %513 = vmatmul.bf16.gmra.mxu0 %v421
      %v514 = vpop.f32.mrf.mxu0
      %v515 = vadd.f32 %v440, %v514
      %v516 = vpop.f32.mrf.mxu0
      %v517 = vadd.f32 %v440, %v516
      %518 = vdwg.mxu0
      %v519 = vmax.f32 %v500, 0.0
      %v520 = vmax.f32 %v502, 0.0
      %v521 = vmax.f32 %v505, 0.0
      %v522 = vmax.f32 %v507, 0.0
      %v523 = vmax.f32 %v510, 0.0
      %v524 = vmax.f32 %v512, 0.0
      %v525 = vmax.f32 %v515, 0.0
      %v526 = vmax.f32 %v517, 0.0
      %v527 = vmin.f32 %v519, 1.0
      %v528 = vmin.f32 %v520, 1.0
      %v529 = vmin.f32 %v521, 1.0
      %v530 = vmin.f32 %v522, 1.0
      %v531 = vmin.f32 %v523, 1.0
      %v532 = vmin.f32 %v524, 1.0
      %v533 = vmin.f32 %v525, 1.0
      %v534 = vmin.f32 %v526, 1.0
      %v535 = vpack.c.bf16 %v528, %v527
      %v536 = vpack.c.bf16 %v530, %v529
      %v537 = vpack.c.bf16 %v532, %v531
      %v538 = vpack.c.bf16 %v534, %v533
      %v539 = vld [vmem:[%s5] sm:$0xf]
      %v540 = vld [vmem:[%s5 + $0x4] sm:$0xf]
      %v541 = vld [vmem:[%s5 + $0x8] sm:$0xf]
      %v542 = vld [vmem:[%s5 + $0xc] sm:$0xf]
      %v543 = vld [vmem:[%s5 + $0x10] sm:$0xf]
      %v544 = vld [vmem:[%s5 + $0x14] sm:$0xf]
      %v545 = vld [vmem:[%s5 + $0x18] sm:$0xf]
      %v546 = vld [vmem:[%s5 + $0x1c] sm:$0xf]
      %v547 = vld [vmem:[%s5 + $0x20] sm:$0xf]
      %v548 = vld [vmem:[%s5 + $0x24] sm:$0xf]
      %v549 = vld [vmem:[%s5 + $0x28] sm:$0xf]
      %v550 = vld [vmem:[%s5 + $0x2c] sm:$0xf]
      %v551 = vld [vmem:[%s5 + $0x30] sm:$0xf]
      %v552 = vld [vmem:[%s5 + $0x34] sm:$0xf]
      %v553 = vld [vmem:[%s5 + $0x38] sm:$0xf]
      %v554 = vld [vmem:[%s5 + $0x3c] sm:$0xf]
      %v555 = vld [vmem:[#allocation2] sm:$0x1]
      %v557 = vperm.slane %v555, 0
      %v575 = vunpack.c.l.b16 %v539
      %v576 = vunpack.c.l.b16 %v540
      %v577 = vunpack.c.l.b16 %v541
      %v578 = vunpack.c.l.b16 %v542
      %v579 = vunpack.c.l.b16 %v543
      %v580 = vunpack.c.l.b16 %v544
      %v581 = vunpack.c.l.b16 %v545
      %v582 = vunpack.c.l.b16 %v546
      %v583 = vunpack.c.l.b16 %v547
      %v584 = vunpack.c.l.b16 %v548
      %v585 = vunpack.c.l.b16 %v549
      %v586 = vunpack.c.l.b16 %v550
      %v587 = vunpack.c.l.b16 %v551
      %v588 = vunpack.c.l.b16 %v552
      %v589 = vunpack.c.l.b16 %v553
      %v590 = vunpack.c.l.b16 %v554
      %v591 = vpack.c.b16 %v576, %v575
      %v592 = vpack.c.b16 %v578, %v577
      %v593 = vpack.c.b16 %v580, %v579
      %v594 = vpack.c.b16 %v582, %v581
      %v595 = vpack.c.b16 %v584, %v583
      %v596 = vpack.c.b16 %v586, %v585
      %v597 = vpack.c.b16 %v588, %v587
      %v598 = vpack.c.b16 %v590, %v589
      %607 = vmatpush.bf16.msra.mxu0 %v598
      %608 = vmatpush.bf16.msra.mxu0 %v597
      %609 = vmatpush.bf16.msra.mxu0 %v596
      %610 = vmatpush.bf16.msra.mxu0 %v595
      %611 = vmatpush.bf16.msra.mxu0 %v594
      %612 = vmatpush.bf16.msra.mxu0 %v593
      %613 = vmatpush.bf16.msra.mxu0 %v592
      %614 = vmatpush.bf16.msra.mxu0 %v591
      %615 = vmatmul.bf16.gmra.mxu0 %v535
      %v616 = vpop.f32.mrf.mxu0
      %v617 = vadd.f32 %v557, %v616
      %v618 = vpop.f32.mrf.mxu0
      %v619 = vadd.f32 %v557, %v618
      %620 = vmatmul.bf16.gmra.mxu0 %v536
      %v621 = vpop.f32.mrf.mxu0
      %v622 = vadd.f32 %v557, %v621
      %v623 = vpop.f32.mrf.mxu0
      %v624 = vadd.f32 %v557, %v623
      %625 = vmatmul.bf16.gmra.mxu0 %v537
      %v626 = vpop.f32.mrf.mxu0
      %v627 = vadd.f32 %v557, %v626
      %v628 = vpop.f32.mrf.mxu0
      %v629 = vadd.f32 %v557, %v628
      %630 = vmatmul.bf16.gmra.mxu0 %v538
      %v631 = vpop.f32.mrf.mxu0
      %v632 = vadd.f32 %v557, %v631
      %v633 = vpop.f32.mrf.mxu0
      %v634 = vadd.f32 %v557, %v633
      %635 = vdwg.mxu0
      %v636 = vxor.u32 %v617, 2147483648
      %v637 = vxor.u32 %v619, 2147483648
      %v638 = vxor.u32 %v622, 2147483648
      %v639 = vxor.u32 %v624, 2147483648
      %v640 = vxor.u32 %v627, 2147483648
      %v641 = vxor.u32 %v629, 2147483648
      %v642 = vxor.u32 %v632, 2147483648
      %v643 = vxor.u32 %v634, 2147483648
      %v644 = vmul.f32 %v636, 1.442695
      %v645 = vpow.pop %v644
      %v646 = vmul.f32 %v637, 1.442695
      %v647 = vpow.pop %v646
      %v648 = vmul.f32 %v638, 1.442695
      %v649 = vpow.pop %v648
      %v650 = vmul.f32 %v639, 1.442695
      %v651 = vpow.pop %v650
      %v652 = vmul.f32 %v640, 1.442695
      %v653 = vpow.pop %v652
      %v654 = vmul.f32 %v641, 1.442695
      %v655 = vpow.pop %v654
      %v656 = vmul.f32 %v642, 1.442695
      %v657 = vpow.pop %v656
      %v658 = vmul.f32 %v643, 1.442695
      %v659 = vpow.pop %v658
      %v660 = vadd.f32 %v645, 1.0
      %v661 = vadd.f32 %v647, 1.0
      %v662 = vadd.f32 %v649, 1.0
      %v663 = vadd.f32 %v651, 1.0
      %v664 = vadd.f32 %v653, 1.0
      %v665 = vadd.f32 %v655, 1.0
      %v666 = vadd.f32 %v657, 1.0
      %v667 = vadd.f32 %v659, 1.0
      %v668 = vrcp.pop %v660
      %v669 = vmul.f32 %v660, %v668
      %v670 = vsub.f32 1.0, %v669
      %v671 = vmul.f32 %v668, %v670
      %v672 = vadd.f32 %v668, %v671
      %vm673 = vweird.f32 %v660
      %vm674 = vweird.f32 %v668
      %vm675 = vmor %vm673, %vm674
      %v676 = vsel %vm675, %v668, %v672
      %v677 = vand.u32 2147483647, %v660
      %vm678 = vcmp.eq.f32.partialorder %v677, 8.507059e+37
      %v679 = vand.u32 %v660, 2147483648
      %v680 = vor.u32 1.1754944e-38, %v679
      %v681 = vsel %vm678, %v680, %v676
      %v682 = vmul.f32 1.0, %v681
      %v683 = vrcp.pop %v661
      %v684 = vmul.f32 %v661, %v683
      %v685 = vsub.f32 1.0, %v684
      %v686 = vmul.f32 %v683, %v685
      %v687 = vadd.f32 %v683, %v686
      %vm688 = vweird.f32 %v661
      %vm689 = vweird.f32 %v683
      %vm690 = vmor %vm688, %vm689
      %v691 = vsel %vm690, %v683, %v687
      %v692 = vand.u32 2147483647, %v661
      %vm693 = vcmp.eq.f32.partialorder %v692, 8.507059e+37
      %v694 = vand.u32 %v661, 2147483648
      %v695 = vor.u32 1.1754944e-38, %v694
      %v696 = vsel %vm693, %v695, %v691
      %v697 = vmul.f32 1.0, %v696
      %v698 = vrcp.pop %v662
      %v699 = vmul.f32 %v662, %v698
      %v700 = vsub.f32 1.0, %v699
      %v701 = vmul.f32 %v698, %v700
      %v702 = vadd.f32 %v698, %v701
      %vm703 = vweird.f32 %v662
      %vm704 = vweird.f32 %v698
      %vm705 = vmor %vm703, %vm704
      %v706 = vsel %vm705, %v698, %v702
      %v707 = vand.u32 2147483647, %v662
      %vm708 = vcmp.eq.f32.partialorder %v707, 8.507059e+37
      %v709 = vand.u32 %v662, 2147483648
      %v710 = vor.u32 1.1754944e-38, %v709
      %v711 = vsel %vm708, %v710, %v706
      %v712 = vmul.f32 1.0, %v711
      %v713 = vrcp.pop %v663
      %v714 = vmul.f32 %v663, %v713
      %v715 = vsub.f32 1.0, %v714
      %v716 = vmul.f32 %v713, %v715
      %v717 = vadd.f32 %v713, %v716
      %vm718 = vweird.f32 %v663
      %vm719 = vweird.f32 %v713
      %vm720 = vmor %vm718, %vm719
      %v721 = vsel %vm720, %v713, %v717
      %v722 = vand.u32 2147483647, %v663
      %vm723 = vcmp.eq.f32.partialorder %v722, 8.507059e+37
      %v724 = vand.u32 %v663, 2147483648
      %v725 = vor.u32 1.1754944e-38, %v724
      %v726 = vsel %vm723, %v725, %v721
      %v727 = vmul.f32 1.0, %v726
      %v728 = vrcp.pop %v664
      %v729 = vmul.f32 %v664, %v728
      %v730 = vsub.f32 1.0, %v729
      %v731 = vmul.f32 %v728, %v730
      %v732 = vadd.f32 %v728, %v731
      %vm733 = vweird.f32 %v664
      %vm734 = vweird.f32 %v728
      %vm735 = vmor %vm733, %vm734
      %v736 = vsel %vm735, %v728, %v732
      %v737 = vand.u32 2147483647, %v664
      %vm738 = vcmp.eq.f32.partialorder %v737, 8.507059e+37
      %v739 = vand.u32 %v664, 2147483648
      %v740 = vor.u32 1.1754944e-38, %v739
      %v741 = vsel %vm738, %v740, %v736
      %v742 = vmul.f32 1.0, %v741
      %v743 = vrcp.pop %v665
      %v744 = vmul.f32 %v665, %v743
      %v745 = vsub.f32 1.0, %v744
      %v746 = vmul.f32 %v743, %v745
      %v747 = vadd.f32 %v743, %v746
      %vm748 = vweird.f32 %v665
      %vm749 = vweird.f32 %v743
      %vm750 = vmor %vm748, %vm749
      %v751 = vsel %vm750, %v743, %v747
      %v752 = vand.u32 2147483647, %v665
      %vm753 = vcmp.eq.f32.partialorder %v752, 8.507059e+37
      %v754 = vand.u32 %v665, 2147483648
      %v755 = vor.u32 1.1754944e-38, %v754
      %v756 = vsel %vm753, %v755, %v751
      %v757 = vmul.f32 1.0, %v756
      %v758 = vrcp.pop %v666
      %v759 = vmul.f32 %v666, %v758
      %v760 = vsub.f32 1.0, %v759
      %v761 = vmul.f32 %v758, %v760
      %v762 = vadd.f32 %v758, %v761
      %vm763 = vweird.f32 %v666
      %vm764 = vweird.f32 %v758
      %vm765 = vmor %vm763, %vm764
      %v766 = vsel %vm765, %v758, %v762
      %v767 = vand.u32 2147483647, %v666
      %vm768 = vcmp.eq.f32.partialorder %v767, 8.507059e+37
      %v769 = vand.u32 %v666, 2147483648
      %v770 = vor.u32 1.1754944e-38, %v769
      %v771 = vsel %vm768, %v770, %v766
      %v772 = vmul.f32 1.0, %v771
      %v773 = vrcp.pop %v667
      %v774 = vmul.f32 %v667, %v773
      %v775 = vsub.f32 1.0, %v774
      %v776 = vmul.f32 %v773, %v775
      %v777 = vadd.f32 %v773, %v776
      %vm778 = vweird.f32 %v667
      %vm779 = vweird.f32 %v773
      %vm780 = vmor %vm778, %vm779
      %v781 = vsel %vm780, %v773, %v777
      %v782 = vand.u32 2147483647, %v667
      %vm783 = vcmp.eq.f32.partialorder %v782, 8.507059e+37
      %v784 = vand.u32 %v667, 2147483648
      %v785 = vor.u32 1.1754944e-38, %v784
      %v786 = vsel %vm783, %v785, %v781
      %v787 = vmul.f32 1.0, %v786
      %vm788 = vcmask 7168
      %789 = vst.msk [vmem:[%s282] sm:$0xff] %vm788, %v682
      %790 = vst.msk [vmem:[%s282 + $0x8] sm:$0xff] %vm788, %v697
      %791 = vst.msk [vmem:[%s282 + $0x10] sm:$0xff] %vm788, %v712
      %792 = vst.msk [vmem:[%s282 + $0x18] sm:$0xff] %vm788, %v727
      %793 = vst.msk [vmem:[%s282 + $0x20] sm:$0xff] %vm788, %v742
      %794 = vst.msk [vmem:[%s282 + $0x28] sm:$0xff] %vm788, %v757
      %795 = vst.msk [vmem:[%s282 + $0x30] sm:$0xff] %vm788, %v772
      %796 = vst.msk [vmem:[%s282 + $0x38] sm:$0xff] %vm788, %v787
      %s797 = smul.u32 8, %s20
      %p798 = scmp.lt.s32.totalorder %s797, 15
      %s799 = scalar_select %p798, %s797, 15
      %s800 = smul.addr %s799, 8
      %s801 = scalar_lea.vmem %s7, %s800
      // Predicated region
      $region49: #{model_forward.1} parent=47 // pred_check
        %p802 = pneg %p190
      $region50: #{model_forward.1} parent=47 // pred_check_branch
        %804 = sbr.rel (%p802) target = $region52
      $region51: #{model_forward.1} parent=47 // pred_region
        %s805 = smul.u32 8, %s20
      $region52: #{model_forward.1} parent=47 // pred_fallthru
        _
    $region48: #{model_forward.1} parent=5 // pred_fallthru
      _
    %p806 = scmp.le.s32.totalorder 2, %s15
    // Predicated region
    $region53: #{model_forward.1} parent=5 // pred_check
      %p807 = pneg %p806
    $region54: #{model_forward.1} parent=5 // pred_check_branch
      %809 = sbr.rel (%p807) target = $region56
    $region55: #{model_forward.1} parent=5 // pred_region
      %s810 = ssub.s32 %s15, 2
      // Predicated region
      $region57: #{model_forward.1} parent=55 // pred_check
        %p811 = pneg %p196
      $region58: #{model_forward.1} parent=55 // pred_check_branch
        %813 = sbr.rel (%p811) target = $region60
      $region59: #{model_forward.1} parent=55 // pred_region
        %s814 = smul.u32 8, %s21
        %p815 = scmp.lt.s32.totalorder %s814, 15
        %s816 = scalar_select %p815, %s814, 15
        %s817 = smul.addr %s816, 8
        %s818 = scalar_lea.vmem %s7, %s817
      $region60: #{model_forward.1} parent=55 // pred_fallthru
        _
    $region56: #{model_forward.1} parent=5 // pred_fallthru
      _
  $region6: #{model_forward.1} parent=0 // loop_footer
    %s19 = sadd.s32 1, %s15
  $region7: #{model_forward.1} parent=0 // loop_footer_branch
    %14 = sbr.rel target = $region3
  $region8: #{model_forward.1} parent=0 // loop_exit
    _

</llo_original>
